<compile_context>
chip_gen: v5e
topology: v5e:2x2
jax: 0.10.0
libtpu: 0.0.40
codegen_flags: <defaults>
</compile_context>

<pallas_src>
import math
from functools import partial

import jax
import jax.numpy as jnp
from jax.experimental import pallas as pl
from jax.experimental.pallas import tpu as pltpu

_LANES = 128


def _bce_kernel(x_ref, t_ref, o_ref, acc_ref, *, n_valid, block_rows,
                nblocks_per_slice):
    c = pl.program_id(0)   # parallel slice (megacore-shardable on v7x)
    i = pl.program_id(1)   # sequential accumulation axis

    @pl.when(i == 0)
    def _():
        acc_ref[...] = jnp.zeros_like(acc_ref)

    x = x_ref[...].astype(jnp.float32)
    t = t_ref[...].astype(jnp.float32)

    # Exact reference math (keep the clamp semantics of the PyTorch module).
    p = jax.nn.sigmoid(x)
    p = jnp.clip(p, 1e-10, 1.0 - 1e-10)
    loss = -(t * jnp.log(p) + (1.0 - t) * jnp.log(1.0 - p))

    tile_elems = block_rows * _LANES
    g = c * nblocks_per_slice + i          # intended global block index
    fully_valid = (g + 1) * tile_elems <= n_valid

    # Fast path: every element of this tile is a real element -> no mask work.
    @pl.when(fully_valid)
    def _():
        acc_ref[...] += loss

    # Tail / redundant blocks: mask by global element index (discards lane
    # padding, partial-edge-block garbage, and clamped redundant blocks).
    @pl.when(jnp.logical_not(fully_valid))
    def _():
        row = jax.lax.broadcasted_iota(jnp.int32, (block_rows, _LANES), 0)
        lane = jax.lax.broadcasted_iota(jnp.int32, (block_rows, _LANES), 1)
        idx = (g * block_rows + row) * _LANES + lane
        acc_ref[...] += jnp.where(idx < n_valid, loss, 0.0)

    # Finalize this slice: one reduction + one block store per slice.
    @pl.when(i == pl.num_programs(1) - 1)
    def _():
        total = jnp.sum(acc_ref[...])
        o_ref[...] = jnp.full((1, 8, _LANES), total, dtype=jnp.float32)


def bce_with_logits_loss(logits, target, *, block_rows=1024, num_slices=2):
    """Pallas TPU implementation of the reference BCEWithLogitsLoss.forward."""
    assert logits.shape == target.shape
    n = int(math.prod(logits.shape))
    assert n > 0

    x = logits.reshape(-1)
    t = target.reshape(-1)

    # Pad the lane dimension only when needed (<= 127 pad elements).
    lane_pad = (-n) % _LANES
    if lane_pad:
        x = jnp.concatenate([x, jnp.zeros((lane_pad,), x.dtype)])
        t = jnp.concatenate([t, jnp.zeros((lane_pad,), t.dtype)])
    rows = (n + lane_pad) // _LANES

    x2 = x.reshape(rows, _LANES)
    t2 = t.reshape(rows, _LANES)

    # Tile sizing: big lane-dense tiles; clamp for small inputs.
    block_rows = max(8, int(block_rows) - int(block_rows) % 8)
    if rows <= block_rows:
        block_rows = rows                      # single block == full row extent
    nblocks_total = -(-rows // block_rows)
    num_slices = max(1, min(int(num_slices), nblocks_total))
    nblocks_per_slice = -(-nblocks_total // num_slices)
    max_block = nblocks_total - 1

    def in_map(c, i):
        # Clamp so redundant steps re-read the last valid block (fully masked).
        return (jnp.minimum(c * nblocks_per_slice + i, max_block), 0)

    tile_spec = pl.BlockSpec((block_rows, _LANES), in_map)

    kernel = partial(_bce_kernel, n_valid=n, block_rows=block_rows,
                     nblocks_per_slice=nblocks_per_slice)

    partials = pl.pallas_call(
        kernel,
        out_shape=jax.ShapeDtypeStruct((num_slices, 8, _LANES), jnp.float32),
        grid_spec=pltpu.PrefetchScalarGridSpec(
            num_scalar_prefetch=0,
            grid=(num_slices, nblocks_per_slice),
            in_specs=[tile_spec, tile_spec],
            out_specs=pl.BlockSpec((1, 8, _LANES), lambda c, i: (c, 0, 0)),
            scratch_shapes=[pltpu.VMEM((block_rows, _LANES), jnp.float32)],
        ),
        compiler_params=pltpu.CompilerParams(
            dimension_semantics=("parallel", "arbitrary"),
        ),
    )(x2, t2)

    return jnp.sum(partials[:, 0, 0]) / jnp.float32(n)


def _reference(logits, target):
    p = jax.nn.sigmoid(logits.astype(jnp.float32))
    p = jnp.clip(p, 1e-10, 1.0 - 1e-10)
    tgt = target.astype(jnp.float32)
    return jnp.mean(-(tgt * jnp.log(p) + (1.0 - tgt) * jnp.log(1.0 - p)))


if __name__ == "__main__":
    key = jax.random.PRNGKey(0)
    k1, k2 = jax.random.split(key)

    # Small NCHW-shaped example consistent with a segmentation-style loss.
    shape = (2, 4, 16, 16)
    logits = jax.random.normal(k1, shape, dtype=jnp.float32) * 2.0
    target = (jax.random.uniform(k2, shape) > 0.5).astype(jnp.float32)

    loss = jax.block_until_ready(bce_with_logits_loss(logits, target))
    ref = _reference(logits, target)
    assert jnp.allclose(loss, ref, rtol=1e-5, atol=1e-6), (loss, ref)

    # Extra sanity checks: ragged sizes, partial edge blocks, multi-slice path.
    k3, k4 = jax.random.split(k2)
    shape2 = (3, 5, 7, 11)                      # 1155 elems, not mult of 128
    lg2 = jax.random.normal(k3, shape2, dtype=jnp.float32) * 2.0
    tg2 = (jax.random.uniform(k4, shape2) > 0.5).astype(jnp.float32)
    l2 = jax.block_until_ready(bce_with_logits_loss(lg2, tg2, block_rows=8))
    assert jnp.allclose(l2, _reference(lg2, tg2), rtol=1e-5, atol=1e-6), l2

    k5, k6 = jax.random.split(k4)
    shape3 = (1, 1, 50, 50)                     # 2500 elems -> redundant block
    lg3 = jax.random.normal(k5, shape3, dtype=jnp.float32) * 2.0
    tg3 = (jax.random.uniform(k6, shape3) > 0.5).astype(jnp.float32)
    l3 = jax.block_until_ready(bce_with_logits_loss(lg3, tg3, block_rows=8))
    assert jnp.allclose(l3, _reference(lg3, tg3), rtol=1e-5, atol=1e-6), l3

    print("KERNEL_OK")
</pallas_src>

<mosaic_0001>
module attributes {stable_mosaic.version = 11 : i64} {
  func.func @_bce_kernel(%arg0: i32, %arg1: i32, %arg2: memref<16x128xf32, #tpu.memory_space<vmem>>, %arg3: memref<16x128xf32, #tpu.memory_space<vmem>>, %arg4: memref<1x8x128xf32, #tpu.memory_space<vmem>>, %arg5: memref<16x128xf32, #tpu.memory_space<vmem>>) attributes {dimension_semantics = [#tpu.dimension_semantics<parallel>, #tpu.dimension_semantics<arbitrary>], iteration_bounds = array<i64: 1, 1>, scalar_prefetch = 0 : i64, scratch_operands = 1 : i64, tpu.core_type = #tpu.core_type<tc>, window_params = [{transform_indices = @transform_0, window_bounds = array<i64: 16, 128>}, {transform_indices = @transform_1, window_bounds = array<i64: 16, 128>}, {transform_indices = @transform_2, window_bounds = array<i64: 1, 8, 128>}]} {
    %c0_i32 = arith.constant 0 : i32
    %0 = arith.cmpi eq, %arg1, %c0_i32 : i32
    %1 = arith.extui %0 : i1 to i32
    %c0_i32_0 = arith.constant 0 : i32
    %2 = arith.cmpi ne, %1, %c0_i32_0 : i32
    scf.if %2 {
      %cst_15 = arith.constant 0.000000e+00 : f32
      %38 = vector.broadcast %cst_15 : f32 to vector<16x128xf32>
      %c0_16 = arith.constant 0 : index
      %c0_17 = arith.constant 0 : index
      %39 = vector.load %arg5[%c0_16, %c0_17] : memref<16x128xf32, #tpu.memory_space<vmem>>, vector<16x128xf32>
      tpu.vector_store %arg5[%c0_16, %c0_17], %38 {strides = array<i32>} : memref<16x128xf32, #tpu.memory_space<vmem>>, vector<16x128xf32>,
    } else {
    }
    %c0 = arith.constant 0 : index
    %c0_1 = arith.constant 0 : index
    %3 = vector.load %arg2[%c0, %c0_1] : memref<16x128xf32, #tpu.memory_space<vmem>>, vector<16x128xf32>
    %c0_2 = arith.constant 0 : index
    %c0_3 = arith.constant 0 : index
    %4 = vector.load %arg3[%c0_2, %c0_3] : memref<16x128xf32, #tpu.memory_space<vmem>>, vector<16x128xf32>
    %5 = arith.negf %3 : vector<16x128xf32>
    %6 = math.exp %5 : vector<16x128xf32>
    %cst = arith.constant 1.000000e+00 : f32
    %7 = vector.broadcast %cst : f32 to vector<16x128xf32>
    %8 = arith.addf %7, %6 : vector<16x128xf32>
    %9 = arith.divf %7, %8 : vector<16x128xf32>
    %cst_4 = arith.constant 1.000000e-10 : f32
    %cst_5 = arith.constant 1.000000e+00 : f32
    %10 = vector.broadcast %cst_4 : f32 to vector<16x128xf32>
    %11 = arith.maximumf %10, %9 : vector<16x128xf32>
    %12 = vector.broadcast %cst_5 : f32 to vector<16x128xf32>
    %13 = arith.minimumf %12, %11 : vector<16x128xf32>
    %14 = math.log %13 : vector<16x128xf32>
    %15 = arith.mulf %4, %14 : vector<16x128xf32>
    %cst_6 = arith.constant 1.000000e+00 : f32
    %16 = vector.broadcast %cst_6 : f32 to vector<16x128xf32>
    %17 = arith.subf %16, %4 : vector<16x128xf32>
    %cst_7 = arith.constant 1.000000e+00 : f32
    %18 = vector.broadcast %cst_7 : f32 to vector<16x128xf32>
    %19 = arith.subf %18, %13 : vector<16x128xf32>
    %20 = math.log %19 : vector<16x128xf32>
    %21 = arith.mulf %17, %20 : vector<16x128xf32>
    %22 = arith.addf %15, %21 : vector<16x128xf32>
    %cst_8 = arith.constant 0.000000e+00 : f32
    %23 = vector.broadcast %cst_8 : f32 to vector<16x128xf32>
    %24 = arith.subf %23, %22 : vector<16x128xf32>
    %c1_i32 = arith.constant 1 : i32
    %25 = arith.muli %arg0, %c1_i32 : i32
    %26 = arith.addi %25, %arg1 : i32
    %c1_i32_9 = arith.constant 1 : i32
    %27 = arith.addi %26, %c1_i32_9 : i32
    %c2048_i32 = arith.constant 2048 : i32
    %28 = arith.muli %27, %c2048_i32 : i32
    %c2048_i32_10 = arith.constant 2048 : i32
    %29 = arith.cmpi sle, %28, %c2048_i32_10 : i32
    %30 = arith.extui %29 : i1 to i32
    %c0_i32_11 = arith.constant 0 : i32
    %31 = arith.cmpi ne, %30, %c0_i32_11 : i32
    scf.if %31 {
      %c0_15 = arith.constant 0 : index
      %c0_16 = arith.constant 0 : index
      %38 = vector.load %arg5[%c0_15, %c0_16] : memref<16x128xf32, #tpu.memory_space<vmem>>, vector<16x128xf32>
      %39 = arith.addf %38, %24 : vector<16x128xf32>
      %c0_17 = arith.constant 0 : index
      %c0_18 = arith.constant 0 : index
      %40 = vector.load %arg5[%c0_17, %c0_18] : memref<16x128xf32, #tpu.memory_space<vmem>>, vector<16x128xf32>
      tpu.vector_store %arg5[%c0_17, %c0_18], %39 {strides = array<i32>} : memref<16x128xf32, #tpu.memory_space<vmem>>, vector<16x128xf32>,
    } else {
    }
    %true = arith.constant true
    %32 = arith.xori %29, %true : i1
    %33 = arith.extui %32 : i1 to i32
    %c0_i32_12 = arith.constant 0 : i32
    %34 = arith.cmpi ne, %33, %c0_i32_12 : i32
    scf.if %34 {
      %38 = tpu.iota {dimensions = array<i32: 0>} : vector<16x128xi32>
      %39 = tpu.iota {dimensions = array<i32: 1>} : vector<16x128xi32>
      %c16_i32 = arith.constant 16 : i32
      %40 = arith.muli %26, %c16_i32 : i32
      %41 = vector.broadcast %40 : i32 to vector<16x128xi32>
      %42 = arith.addi %41, %38 : vector<16x128xi32>
      %c128_i32 = arith.constant 128 : i32
      %43 = vector.broadcast %c128_i32 : i32 to vector<16x128xi32>
      %44 = arith.muli %42, %43 : vector<16x128xi32>
      %45 = arith.addi %44, %39 : vector<16x128xi32>
      %c0_15 = arith.constant 0 : index
      %c0_16 = arith.constant 0 : index
      %46 = vector.load %arg5[%c0_15, %c0_16] : memref<16x128xf32, #tpu.memory_space<vmem>>, vector<16x128xf32>
      %c2048_i32_17 = arith.constant 2048 : i32
      %47 = vector.broadcast %c2048_i32_17 : i32 to vector<16x128xi32>
      %48 = arith.cmpi slt, %45, %47 : vector<16x128xi32>
      %cst_18 = arith.constant 0.000000e+00 : f32
      %49 = vector.broadcast %cst_18 : f32 to vector<16x128xf32>
      %50 = arith.select %48, %24, %49 : vector<16x128xi1>, vector<16x128xf32>
      %51 = arith.addf %46, %50 : vector<16x128xf32>
      %c0_19 = arith.constant 0 : index
      %c0_20 = arith.constant 0 : index
      %52 = vector.load %arg5[%c0_19, %c0_20] : memref<16x128xf32, #tpu.memory_space<vmem>>, vector<16x128xf32>
      tpu.vector_store %arg5[%c0_19, %c0_20], %51 {strides = array<i32>} : memref<16x128xf32, #tpu.memory_space<vmem>>, vector<16x128xf32>,
    } else {
    }
    %c0_i32_13 = arith.constant 0 : i32
    %35 = arith.cmpi eq, %arg1, %c0_i32_13 : i32
    %36 = arith.extui %35 : i1 to i32
    %c0_i32_14 = arith.constant 0 : i32
    %37 = arith.cmpi ne, %36, %c0_i32_14 : i32
    scf.if %37 {
      %c0_15 = arith.constant 0 : index
      %c0_16 = arith.constant 0 : index
      %38 = vector.load %arg5[%c0_15, %c0_16] : memref<16x128xf32, #tpu.memory_space<vmem>>, vector<16x128xf32>
      %39 = vector.shape_cast %38 : vector<16x128xf32> to vector<1x16x128xf32>
      %cst_17 = arith.constant dense<0.000000e+00> : vector<1xf32>
      %40 = vector.multi_reduction <add>, %39, %cst_17 [1, 2] : vector<1x16x128xf32> to vector<1xf32>
      %41 = vector.shape_cast %40 : vector<1xf32> to vector<1x1x1xf32>
      %42 = vector.extract %41[0, 0, 0] : f32 from vector<1x1x1xf32>
      %43 = vector.broadcast %42 : f32 to vector<1x8x128xf32>
      %c0_18 = arith.constant 0 : index
      %c0_19 = arith.constant 0 : index
      %c0_20 = arith.constant 0 : index
      %44 = vector.load %arg4[%c0_18, %c0_19, %c0_20] : memref<1x8x128xf32, #tpu.memory_space<vmem>>, vector<1x8x128xf32>
      tpu.vector_store %arg4[%c0_18, %c0_19, %c0_20], %43 {strides = array<i32>} : memref<1x8x128xf32, #tpu.memory_space<vmem>>, vector<1x8x128xf32>,
    } else {
    }
    return
  }
  func.func @transform_0(%arg0: i32, %arg1: i32) -> (i32, i32) {
    %c1_i32 = arith.constant 1 : i32
    %0 = arith.muli %arg0, %c1_i32 : i32
    %1 = arith.addi %0, %arg1 : i32
    %c0_i32 = arith.constant 0 : i32
    %2 = arith.minsi %1, %c0_i32 : i32
    %c0_i32_0 = arith.constant 0 : i32
    %c0_i32_1 = arith.constant 0 : i32
    return %2, %c0_i32_0 : i32, i32
  }
  func.func @transform_1(%arg0: i32, %arg1: i32) -> (i32, i32) {
    %c1_i32 = arith.constant 1 : i32
    %0 = arith.muli %arg0, %c1_i32 : i32
    %1 = arith.addi %0, %arg1 : i32
    %c0_i32 = arith.constant 0 : i32
    %2 = arith.minsi %1, %c0_i32 : i32
    %c0_i32_0 = arith.constant 0 : i32
    %c0_i32_1 = arith.constant 0 : i32
    return %2, %c0_i32_0 : i32, i32
  }
  func.func @transform_2(%arg0: i32, %arg1: i32) -> (i32, i32, i32) {
    %c0_i32 = arith.constant 0 : i32
    %c0_i32_0 = arith.constant 0 : i32
    %c0_i32_1 = arith.constant 0 : i32
    return %arg0, %c0_i32, %c0_i32_0 : i32, i32, i32
  }
}

</mosaic_0001>

<llo_original>
// kernel: tpu_custom_call.1
$region0: #{tpu_custom_call.1}
  #allocation0 [shape = 'u32[]', space=smem, size = 0x4, offset = 0x4, fixed_abs, tag = 'smem constant byte address 0x4 - core index']
  #allocation1 [shape = 'u32[72,128]{1,0:T(1,128)}', space=vmem, size = 0x9000, scoped, tag = 'internal scratch']
  #allocation2 [shape = 'f32[16,128]{1,0:T(8,128)}', space=vmem, size = 0x2000, scoped, tag = 'scratch operand']
  %s0 = inlined_call_operand.hbm [shape: f32[16,128], index: 0, kind: input, shape index: {}]
  %s1 = inlined_call_operand.hbm [shape: f32[16,128], index: 1, kind: input, shape index: {}]
  %s2 = inlined_call_operand.hbm [shape: f32[1,8,128], index: 2, kind: output, shape index: {}]
  %s3 = sld [smem:[#allocation0]]
  $region42: #{tpu_custom_call.1} parent=0
    _
  %s5 = ssub.s32 1, %s3
  %s6 = scalar_select 0, %s5, %s3
  $region1: #{tpu_custom_call.1} parent=0
    #allocation3 [shape = 'u8[8192]{0}', space=vmem, size = 0x2000, scoped, tag = 'input window, operand 0, single buffered']
    #allocation4 [shape = 's32[1]{0}', space=sflag, size = 0x4, scoped, tag = 'scoped memory for tpu_custom_call.1']
    #allocation5 [shape = 's32[1]{0}', space=sflag, size = 0x4, scoped, tag = 'scoped memory for tpu_custom_call.1']
    #allocation6 [shape = 'u8[8192]{0}', space=vmem, size = 0x2000, scoped, tag = 'input window, operand 1, single buffered']
    #allocation7 [shape = 's32[1]{0}', space=sflag, size = 0x4, scoped, tag = 'scoped memory for tpu_custom_call.1']
    #allocation8 [shape = 'u8[4096]{0}', space=vmem, size = 0x1000, scoped, tag = 'output window, operand 0, single buffered']
    %7 = vsyncpa [#allocation4], 0
    %8 = vsyncpa [#allocation7], 0
    %9 = vsyncpa [#allocation5], 0
    // Predicated region
    $region2: #{tpu_custom_call.1} parent=1 // pred_check
      _
    $region3: #{tpu_custom_call.1} parent=1 // pred_check_branch
      %11 = sbr.rel (0) target = $region5
    $region4: #{tpu_custom_call.1} parent=1 // pred_region
      %s12 = sadd.s32 0, 0
      %p13 = scmp.lt.s32.totalorder %s12, 0
      %s14 = scalar_select %p13, %s12, 0
      %s15 = smul.u32 2, %s14
      %17 = vsyncadd [#allocation4], 0
      %s18 = smul.addr %s15, 8
      %s19 = scalar_lea.hbm %s0, %s18
      %s20 = sshll.u32 %s19, 4
      %s21 = int_to_ptr.hbm [resolvable:$true] %s20
      %s22 = sshll.u32 [#allocation3], 4
      %s23 = int_to_ptr.vmem [resolvable:$true] %s22
      %28 = dma.hbm_to_vmem [thread:$0]  %s21, 256, %s23, [#allocation4], 128, 128, 8
    $region5: #{tpu_custom_call.1} parent=1 // pred_fallthru
      _
    // Predicated region
    $region6: #{tpu_custom_call.1} parent=1 // pred_check
      _
    $region7: #{tpu_custom_call.1} parent=1 // pred_check_branch
      %30 = sbr.rel (0) target = $region9
    $region8: #{tpu_custom_call.1} parent=1 // pred_region
      %s31 = sadd.s32 0, 0
      %p32 = scmp.lt.s32.totalorder %s31, 0
      %s33 = scalar_select %p32, %s31, 0
      %s34 = smul.u32 2, %s33
      %36 = vsyncadd [#allocation7], 0
      %s37 = smul.addr %s34, 8
      %s38 = scalar_lea.hbm %s1, %s37
      %s39 = sshll.u32 %s38, 4
      %s40 = int_to_ptr.hbm [resolvable:$true] %s39
      %s41 = sshll.u32 [#allocation6], 4
      %s42 = int_to_ptr.vmem [resolvable:$true] %s41
      %47 = dma.hbm_to_vmem [thread:$0]  %s40, 256, %s42, [#allocation7], 128, 128, 8
    $region9: #{tpu_custom_call.1} parent=1 // pred_fallthru
      _
    // Predicated region
    $region10: #{tpu_custom_call.1} parent=1 // pred_check
      _
    $region11: #{tpu_custom_call.1} parent=1 // pred_check_branch
      %49 = sbr.rel (0) target = $region13
    $region12: #{tpu_custom_call.1} parent=1 // pred_region
      %51 = dma.done [#allocation4], 256
    $region13: #{tpu_custom_call.1} parent=1 // pred_fallthru
      _
    // Predicated region
    $region14: #{tpu_custom_call.1} parent=1 // pred_check
      _
    $region15: #{tpu_custom_call.1} parent=1 // pred_check_branch
      %53 = sbr.rel (0) target = $region17
    $region16: #{tpu_custom_call.1} parent=1 // pred_region
      %55 = dma.done [#allocation7], 256
    $region17: #{tpu_custom_call.1} parent=1 // pred_fallthru
      _
    %s56 = sadd.s32 0, 0
    %p57 = scmp.lt.s32.totalorder %s56, 0
    %s58 = scalar_select %p57, %s56, 0
    %s59 = smul.u32 2, %s58
    %s60 = sadd.s32 0, 0
    %p61 = scmp.lt.s32.totalorder %s60, 0
    %s62 = scalar_select %p61, %s60, 0
    %s63 = smul.u32 2, %s62
    %p64 = scmp.eq.s32.totalorder 0, 0
    // Predicated region
    $region18: #{tpu_custom_call.1} parent=1 // pred_check
      %p65 = pneg %p64
    $region19: #{tpu_custom_call.1} parent=1 // pred_check_branch
      %67 = sbr.rel (%p65) target = $region21
    $region20: #{tpu_custom_call.1} parent=1 // pred_region
      %68 = vst [vmem:[#allocation2] sm:$0xff] 0.0
      %69 = vst [vmem:[#allocation2 + $0x8] sm:$0xff] 0.0
    $region21: #{tpu_custom_call.1} parent=1 // pred_fallthru
      _
    %v70 = vld [vmem:[#allocation3] sm:$0xff]
    %v71 = vld [vmem:[#allocation3 + $0x8] sm:$0xff]
    %v72 = vld [vmem:[#allocation6] sm:$0xff]
    %v73 = vld [vmem:[#allocation6 + $0x8] sm:$0xff]
    %v74 = vxor.u32 %v70, 2147483648
    %v75 = vxor.u32 %v71, 2147483648
    %v76 = vmul.f32 %v74, 1.442695
    %v77 = vpow.pop %v76
    %v78 = vmul.f32 %v75, 1.442695
    %v79 = vpow.pop %v78
    %v80 = vadd.f32 %v77, 1.0
    %v81 = vadd.f32 %v79, 1.0
    %v82 = vrcp.pop %v80
    %v83 = vmul.f32 %v80, %v82
    %v84 = vsub.f32 1.0, %v83
    %v85 = vmul.f32 %v82, %v84
    %v86 = vadd.f32 %v82, %v85
    %vm87 = vweird.f32 %v80
    %vm88 = vweird.f32 %v82
    %vm89 = vmor %vm87, %vm88
    %v90 = vsel %vm89, %v82, %v86
    %v91 = vand.u32 2147483647, %v80
    %vm92 = vcmp.eq.f32.partialorder %v91, 8.507059e+37
    %v93 = vand.u32 %v80, 2147483648
    %v94 = vor.u32 1.1754944e-38, %v93
    %v95 = vsel %vm92, %v94, %v90
    %v96 = vmul.f32 1.0, %v95
    %v97 = vrcp.pop %v81
    %v98 = vmul.f32 %v81, %v97
    %v99 = vsub.f32 1.0, %v98
    %v100 = vmul.f32 %v97, %v99
    %v101 = vadd.f32 %v97, %v100
    %vm102 = vweird.f32 %v81
    %vm103 = vweird.f32 %v97
    %vm104 = vmor %vm102, %vm103
    %v105 = vsel %vm104, %v97, %v101
    %v106 = vand.u32 2147483647, %v81
    %vm107 = vcmp.eq.f32.partialorder %v106, 8.507059e+37
    %v108 = vand.u32 %v81, 2147483648
    %v109 = vor.u32 1.1754944e-38, %v108
    %v110 = vsel %vm107, %v109, %v105
    %v111 = vmul.f32 1.0, %v110
    %v112 = vmax.f32 %v96, 1e-10
    %v113 = vmax.f32 %v111, 1e-10
    %v114 = vmin.f32 %v112, 1.0
    %v115 = vmin.f32 %v113, 1.0
    %v116 = vlog2.pop %v114
    %v117 = vmul.f32 %v116, 0.6931472
    %v118 = vlog2.pop %v115
    %v119 = vmul.f32 %v118, 0.6931472
    %v120 = vmul.f32 %v72, %v117
    %v121 = vmul.f32 %v73, %v119
    %v122 = vsub.f32 1.0, %v72
    %v123 = vsub.f32 1.0, %v73
    %v124 = vsub.f32 1.0, %v114
    %v125 = vsub.f32 1.0, %v115
    %v126 = vlog2.pop %v124
    %v127 = vmul.f32 %v126, 0.6931472
    %v128 = vlog2.pop %v125
    %v129 = vmul.f32 %v128, 0.6931472
    %v130 = vmul.f32 %v122, %v127
    %v131 = vmul.f32 %v123, %v129
    %v132 = vadd.f32 %v120, %v130
    %v133 = vadd.f32 %v121, %v131
    %v134 = vsub.f32 0.0, %v132
    %v135 = vsub.f32 0.0, %v133
    %s136 = sadd.s32 0, 0
    %s137 = sadd.s32 %s136, 1
    %s138 = smul.u32 %s137, 2048
    %p139 = scmp.le.s32.totalorder %s138, 2048
    // Predicated region
    $region22: #{tpu_custom_call.1} parent=1 // pred_check
      %p140 = pneg %p139
    $region23: #{tpu_custom_call.1} parent=1 // pred_check_branch
      %142 = sbr.rel (%p140) target = $region25
    $region24: #{tpu_custom_call.1} parent=1 // pred_region
      %v143 = vld [vmem:[#allocation2] sm:$0xff]
      %v144 = vld [vmem:[#allocation2 + $0x8] sm:$0xff]
      %v145 = vadd.f32 %v143, %v134
      %v146 = vadd.f32 %v144, %v135
      %147 = vst [vmem:[#allocation2] sm:$0xff] %v145
      %148 = vst [vmem:[#allocation2 + $0x8] sm:$0xff] %v146
    $region25: #{tpu_custom_call.1} parent=1 // pred_fallthru
      _
    %p149 = scmp.gt.s32.totalorder %s138, 2048
    // Predicated region
    $region26: #{tpu_custom_call.1} parent=1 // pred_check
      %p150 = pneg %p149
    $region27: #{tpu_custom_call.1} parent=1 // pred_check_branch
      %152 = sbr.rel (%p150) target = $region29
    $region28: #{tpu_custom_call.1} parent=1 // pred_region
      %v153 = vlaneseq
      %v154 = vshrl.u32 %v153, 7
      %v155 = vadd.s32 %v154, 8
      %v156 = vlaneseq
      %v157 = vand.u32 %v156, 127
      %s158 = smul.u32 %s136, 16
      %v159 = vstv %s158
      %v160 = vadd.s32 %v159, %v154
      %v161 = vadd.s32 %v159, %v155
      %v162 = vmul.u32 %v160, 128
      %v163 = vmul.u32 %v161, 128
      %v164 = vadd.s32 %v162, %v157
      %v165 = vadd.s32 %v163, %v157
      %v166 = vld [vmem:[#allocation2] sm:$0xff]
      %v167 = vld [vmem:[#allocation2 + $0x8] sm:$0xff]
      %vm168 = vcmp.lt.s32.totalorder %v164, 2048
      %vm169 = vcmp.lt.s32.totalorder %v165, 2048
      %v170 = vsel %vm168, %v134, 0.0
      %v171 = vsel %vm169, %v135, 0.0
      %v172 = vadd.f32 %v166, %v170
      %v173 = vadd.f32 %v167, %v171
      %174 = vst [vmem:[#allocation2] sm:$0xff] %v172
      %175 = vst [vmem:[#allocation2 + $0x8] sm:$0xff] %v173
    $region29: #{tpu_custom_call.1} parent=1 // pred_fallthru
      _
    // Predicated region
    $region30: #{tpu_custom_call.1} parent=1 // pred_check
      %p176 = pneg %p64
    $region31: #{tpu_custom_call.1} parent=1 // pred_check_branch
      %178 = sbr.rel (%p176) target = $region33
    $region32: #{tpu_custom_call.1} parent=1 // pred_region
      %v179 = vld [vmem:[#allocation2] sm:$0xff]
      %v180 = vld [vmem:[#allocation2 + $0x8] sm:$0xff]
      %v181 = vadd.f32 %v179, %v180
      %182 = vadd.xlane.f32.xlu0 %v181
      %v183 = vpop.xlane.xlu0 %182
      %v184 = vrot.slane %v183, 4
      %v185 = vadd.f32 %v183, %v184
      %v186 = vrot.slane %v185, 2
      %v187 = vadd.f32 %v185, %v186
      %v188 = vrot.slane %v187, 1
      %v189 = vadd.f32 %v187, %v188
      %s190 = vtos %v189
      %v191 = vstv %s190
      %192 = vst [vmem:[#allocation8] sm:$0xff] %v191
    $region33: #{tpu_custom_call.1} parent=1 // pred_fallthru
      _
    // Predicated region
    $region34: #{tpu_custom_call.1} parent=1 // pred_check
      _
    $region35: #{tpu_custom_call.1} parent=1 // pred_check_branch
      %194 = sbr.rel (0) target = $region37
    $region36: #{tpu_custom_call.1} parent=1 // pred_region
      %196 = vsyncadd [#allocation5], 0
      %s198 = sshll.u32 [#allocation8], 4
      %s199 = int_to_ptr.vmem [resolvable:$true] %s198
      %s200 = sshll.u32 %s2, 4
      %s201 = int_to_ptr.hbm [resolvable:$true] %s200
      %203 = dma.vmem_to_hbm [thread:$0]  %s199, 128, %s201, [#allocation5]
    $region37: #{tpu_custom_call.1} parent=1 // pred_fallthru
      _
    // Predicated region
    $region38: #{tpu_custom_call.1} parent=1 // pred_check
      _
    $region39: #{tpu_custom_call.1} parent=1 // pred_check_branch
      %205 = sbr.rel (0) target = $region41
    $region40: #{tpu_custom_call.1} parent=1 // pred_region
      %207 = dma.done [#allocation5], 128
    $region41: #{tpu_custom_call.1} parent=1 // pred_fallthru
      _
    %208 = vsyncpa [#allocation4], 1
    %209 = vsyncpa [#allocation7], 1
    %210 = vsyncpa [#allocation5], 1

</llo_original>
